<compile_context>
chip_gen: v5e
topology: v5e:2x2
jax: 0.10.0
libtpu: 0.0.40
codegen_flags: <defaults>
</compile_context>

<pallas_src>
import numpy as np

import jax
import jax.numpy as jnp
from jax import lax
from jax.experimental import pallas as pl
from jax.experimental.pallas import tpu as pltpu


_FOCAL_LANES = 128  # lane-dense width of the per-batch focal-sum output block


def _pick_hw_tile(hw):
    """Largest lane tile (<=8192, multiple of 128) that divides hw with >=2 steps."""
    for c in (8192, 4096, 2048, 1024, 512, 256, 128):
        if hw % c == 0 and hw // c >= 2:
            return c
    return hw


def _vmem_limit_bytes(per_step_bytes):
    # ~3x the double-buffered per-step working set, clamped to [8 MiB, 32 MiB];
    # leaves headroom on v7x's 64 MiB physical VMEM while permitting large tiles.
    return int(min(max(3 * per_step_bytes, 8 * 1024 * 1024), 32 * 1024 * 1024))


# ----------------------------------------------------------------------------
# Kernel 1: fused focal loss + center-loss partial sums (one pass over gt hm).
# ----------------------------------------------------------------------------
def _focal_center_kernel(pred_ref, gt_ref, ft_ref, s_ref, focal_ref):
    # pred_ref, gt_ref : (1, Ncls, hw_t)  predicted / gt heat-map tile (one batch)
    # ft_ref           : (1, D, hw_t)     feature tile (one batch)
    # s_ref (out)      : (1, Ncls, D+2)   resident per batch, MXU-accumulated:
    #                    cols [0:D]  = sum_hw pos*ft        (cross term)
    #                    col  D      = sum_hw pos*||ft||^2  (term_ft)
    #                    col  D+1    = sum_hw pos           (per-class counts)
    # focal_ref (out)  : (1, 1, 128)      resident per batch: focal sum (all lanes)
    h = pl.program_id(1)

    @pl.when(h == 0)
    def _init():
        s_ref[...] = jnp.zeros_like(s_ref)
        focal_ref[...] = jnp.zeros_like(focal_ref)

    pred = pred_ref[0].astype(jnp.float32)       # (Ncls, hw_t)
    gt = gt_ref[0].astype(jnp.float32)           # (Ncls, hw_t)
    ft = ft_ref[0].astype(jnp.float32)           # (D, hw_t)

    # ---- CenterNet focal loss (pos/neg disjoint -> one log + one selected weight).
    # Assumes well-formed heat maps (gt in [0,1]); matches torch eq(1)/lt(1) there.
    p = jnp.clip(pred, 1e-4, 1.0 - 1e-4)         # torch _sigmoid clamp / log safety
    omp = 1.0 - p
    is_pos = gt == 1.0
    pos = is_pos.astype(jnp.float32)
    logt = jnp.log(jnp.where(is_pos, p, omp))
    w = 1.0 - gt
    w2 = w * w
    wsel = jnp.where(is_pos, omp * omp, p * p * (w2 * w2))   # pos: (1-p)^2, neg: p^2(1-gt)^4
    # Full in-kernel reduce (XLU is free filler here); per-batch scalar accumulator.
    focal_ref[...] += jnp.sum(logt * wsel)

    # ---- Center-loss partials on the (otherwise idle) MXU.
    # ||ft-c||^2 = ||ft||^2 - 2 c.ft + ||c||^2; augment ft with a ||ft||^2 row and a
    # ones row so one pos @ ft_aug^T contraction yields cross terms, per-class
    # sum pos*||ft||^2 and per-class positive counts (no VALU/XLU class reductions).
    hw_t = ft.shape[1]
    sq = jnp.sum(ft * ft, axis=0, keepdims=True)              # (1, hw_t)
    extras = jnp.where(
        lax.broadcasted_iota(jnp.int32, (2, hw_t), 0) == 0,
        jnp.broadcast_to(sq, (2, hw_t)), 1.0)                  # row0=||ft||^2, row1=1
    ft_aug = jnp.concatenate([ft, extras], axis=0)             # (D+2, hw_t); D%8==0 keeps it aligned
    s_ref[0] += lax.dot_general(pos, ft_aug, (((1,), (1,)), ((), ())),
                                preferred_element_type=jnp.float32)


def focal_and_center_loss(pred_hm, gt_hm, ft, center):
    """Returns (CenterNet focal hm_loss, center loss at gt==1 peaks)."""
    # TODO(synk): CenterLoss_gt_eq1_cuda source (custom CUDA ext) unavailable;
    # implemented as mean squared distance of features to their class center at
    # gt heat-map peaks (gt == 1); the predicted heat map is not used by it.
    B, Ncls, H, W = pred_hm.shape
    D = ft.shape[1]
    HW = H * W
    hw_t = _pick_hw_tile(HW)
    n_hw = HW // hw_t
    DA = D + 2

    # Keep input dtypes unchanged (bf16 stays bf16 through HBM); cast per-tile in VMEM.
    pred3 = pred_hm.reshape(B, Ncls, HW)
    gt3 = gt_hm.reshape(B, Ncls, HW)
    ft3 = ft.reshape(B, D, HW)

    itm = lambda a: a.dtype.itemsize
    per_step = (2 * hw_t * (Ncls * itm(pred3) + Ncls * itm(gt3) + D * itm(ft3))
                + 4 * (Ncls * DA + _FOCAL_LANES))
    cost = pl.CostEstimate(
        flops=int(14 * B * Ncls * HW + 3 * B * D * HW + 2 * B * Ncls * DA * HW),
        transcendentals=int(B * Ncls * HW),
        bytes_accessed=int(pred3.size * itm(pred3) + gt3.size * itm(gt3)
                           + ft3.size * itm(ft3)
                           + 4 * B * (Ncls * DA + _FOCAL_LANES)))

    # TODO(synk): if B == 1 on v7x, split HW into a parallel outer axis so both
    # TensorCores get work (no-op on single-TC v5e/v6e).
    s_out, focal_out = pl.pallas_call(
        _focal_center_kernel,
        grid=(B, n_hw),
        in_specs=[
            pl.BlockSpec((1, Ncls, hw_t), lambda b, h: (b, 0, h)),
            pl.BlockSpec((1, Ncls, hw_t), lambda b, h: (b, 0, h)),
            pl.BlockSpec((1, D, hw_t), lambda b, h: (b, 0, h)),
        ],
        out_specs=[
            pl.BlockSpec((1, Ncls, DA), lambda b, h: (b, 0, 0)),
            pl.BlockSpec((1, 1, _FOCAL_LANES), lambda b, h: (b, 0, 0)),
        ],
        out_shape=[
            jax.ShapeDtypeStruct((B, Ncls, DA), jnp.float32),
            jax.ShapeDtypeStruct((B, 1, _FOCAL_LANES), jnp.float32),
        ],
        compiler_params=pltpu.CompilerParams(
            dimension_semantics=("parallel", "arbitrary"),
            vmem_limit_bytes=_vmem_limit_bytes(per_step)),
        cost_estimate=cost,
    )(pred3, gt3, ft3)

    # Tiny final assembly in plain JAX (s_out is only (B, Ncls, D+2)).
    cen = center.astype(jnp.float32)
    censq = jnp.sum(cen * cen, axis=1)                        # (Ncls,)
    cross = jnp.sum(s_out[:, :, :D] * cen[None, :, :])        # sum pos * (c . ft)
    term_ft = jnp.sum(s_out[:, :, D])                         # sum pos * ||ft||^2
    counts = jnp.sum(s_out[:, :, D + 1], axis=0)              # (Ncls,) positive counts
    num_pos = jnp.sum(counts)
    term_cc = jnp.sum(counts * censq)                         # sum pos * ||c||^2
    focal_sum = jnp.sum(focal_out[:, 0, 0])

    hm_loss = jnp.where(num_pos == 0, -focal_sum,
                        -focal_sum / jnp.maximum(num_pos, 1.0))
    center_sq = term_ft - 2.0 * cross + term_cc
    center_loss = jnp.where(num_pos > 0,
                            center_sq / (2.0 * jnp.maximum(num_pos, 1.0)), 0.0)
    return hm_loss, center_loss


# ----------------------------------------------------------------------------
# Kernel 2: fused gather-at-ind (== _transpose_and_gather_feat) for N reg maps.
# ----------------------------------------------------------------------------
def _make_gather_kernel(n_maps):
    def kernel(ind_ref, *refs):
        # ind_ref   : (1, K, 1) int32 gather indices (one batch, resident)
        # refs[:n]  : (1, C_i, hw_t)  feature-map tiles (wh, reg, ...)
        # refs[n:]  : (1, C_i, K)     lane-dense gathered outputs, resident per batch
        feat_refs = refs[:n_maps]
        out_refs = refs[n_maps:]
        h = pl.program_id(1)

        @pl.when(h == 0)
        def _init():
            for o in out_refs:
                o[...] = jnp.zeros_like(o)

        idx = ind_ref[0]                                        # (K, 1) int32
        k = idx.shape[0]
        hw_t = feat_refs[0].shape[2]
        lane = lax.broadcasted_iota(jnp.int32, (k, hw_t), 1) + h * hw_t
        # One-hot built ONCE per tile, reused for every map (wh + reg fused).
        # NOTE: out-of-range ind gathers zeros (padded entries must have mask=0).
        onehot = (idx == lane).astype(jnp.float32)              # (K, hw_t)
        for f_ref, o_ref in zip(feat_refs, out_refs):
            feat = f_ref[0].astype(jnp.float32)                 # (C, hw_t)
            # (C, K): K on the lane axis -> lane-dense stores / MXU result layout.
            o_ref[0] += lax.dot_general(feat, onehot, (((1,), (1,)), ((), ())),
                                        preferred_element_type=jnp.float32)
    return kernel


def gather_at_ind(maps, ind):
    """Gather each (B, C_i, H, W) map at flat indices `ind` -> tuple of (B, K, C_i)."""
    B, _, H, W = maps[0].shape
    K = ind.shape[1]
    HW = H * W
    hw_t = _pick_hw_tile(HW)
    n_hw = HW // hw_t

    ind3 = ind.astype(jnp.int32).reshape(B, K, 1)
    feats = [m.reshape(B, m.shape[1], HW) for m in maps]

    in_specs = [pl.BlockSpec((1, K, 1), lambda b, h: (b, 0, 0))]
    in_specs += [pl.BlockSpec((1, f.shape[1], hw_t), lambda b, h: (b, 0, h))
                 for f in feats]
    out_specs = [pl.BlockSpec((1, f.shape[1], K), lambda b, h: (b, 0, 0))
                 for f in feats]
    out_shape = [jax.ShapeDtypeStruct((B, f.shape[1], K), jnp.float32)
                 for f in feats]

    map_bytes = sum(f.shape[1] * f.dtype.itemsize for f in feats)
    per_step = 2 * (K * 4 + hw_t * map_bytes) + 4 * K * sum(f.shape[1] for f in feats)
    cost = pl.CostEstimate(
        flops=int(2 * B * K * HW + sum(2 * B * f.shape[1] * K * HW for f in feats)),
        transcendentals=0,
        bytes_accessed=int(ind3.size * 4
                           + sum(f.size * f.dtype.itemsize for f in feats)
                           + 4 * B * K * sum(f.shape[1] for f in feats)))

    preds = pl.pallas_call(
        _make_gather_kernel(len(feats)),
        grid=(B, n_hw),
        in_specs=in_specs,
        out_specs=out_specs,
        out_shape=out_shape,
        compiler_params=pltpu.CompilerParams(
            dimension_semantics=("parallel", "arbitrary"),
            vmem_limit_bytes=_vmem_limit_bytes(per_step)),
        cost_estimate=cost,
    )(ind3, *feats)
    if not isinstance(preds, (list, tuple)):
        preds = (preds,)
    # Kernel output is lane-dense (B, C, K); tiny transpose to (B, K, C) in JAX.
    return tuple(jnp.transpose(p, (0, 2, 1)) for p in preds)


def _masked_l1(pred, mask, target):
    """RegL1Loss on already-gathered (B, K, C) predictions."""
    m = mask.astype(jnp.float32)[..., None]
    t = target.astype(jnp.float32)
    num = jnp.sum(jnp.abs(pred * m - t * m))
    den = jnp.sum(mask.astype(jnp.float32)) * jnp.float32(target.shape[-1]) + 1e-4
    return num / den


# ----------------------------------------------------------------------------
# CtdetLoss_NFS.forward equivalent
# ----------------------------------------------------------------------------
class Opt:
    num_stacks = 1
    mse_loss = False          # -> FocalLoss
    eq1 = True                # -> CenterLoss_gt_eq1
    reg_loss = 'l1'           # -> RegL1Loss
    dense_wh = False
    norm_wh = False
    cat_spec_wh = False       # -> crit_wh == crit_reg (RegL1Loss)
    reg_offset = True
    hm_weight = 1.0
    wh_weight = 0.1
    off_weight = 1.0
    center_weight = 0.1
    eval_oracle_hm = False
    eval_oracle_wh = False
    eval_oracle_offset = False


def ctdet_loss_nfs_forward(outputs, batch, opt):
    # TODO(synk): mse_loss / dense_wh / norm_wh / cat_spec_wh / 'sl1' variants and
    # the eval_oracle_* host-numpy gen_oracle_map paths are not implemented.
    center_loss, hm_loss, wh_loss, off_loss = 0.0, 0.0, 0.0, 0.0
    for s in range(opt.num_stacks):
        output = outputs[s]
        # Fused single pass over batch['hm'] produces both losses (shared HBM read).
        hm_l, c_l = focal_and_center_loss(output['hm'], batch['hm'],
                                          output['ft'], output['center'])
        hm_loss += hm_l / opt.num_stacks
        if opt.center_weight > 0:
            center_loss += c_l / opt.num_stacks

        # wh + offset regression share ind/mask -> a single fused gather kernel.
        reg_items = []
        if opt.wh_weight > 0:
            reg_items.append(('wh', output['wh'], batch['wh']))
        if opt.reg_offset and opt.off_weight > 0:
            reg_items.append(('off', output['reg'], batch['reg']))
        if reg_items:
            preds = gather_at_ind(tuple(m for _, m, _ in reg_items), batch['ind'])
            for (name, _, tgt), pred in zip(reg_items, preds):
                l = _masked_l1(pred, batch['reg_mask'], tgt) / opt.num_stacks
                if name == 'wh':
                    wh_loss += l
                else:
                    off_loss += l

    loss = (opt.hm_weight * hm_loss + opt.wh_weight * wh_loss +
            opt.off_weight * off_loss + opt.center_weight * center_loss)
    loss_stats = {'loss': loss, 'hm_loss': hm_loss, 'wh_loss': wh_loss,
                  'off_loss': off_loss, 'center_loss': center_loss}
    return loss, loss_stats


# ----------------------------------------------------------------------------
# Pure-JAX reference (for an in-script correctness check).
# ----------------------------------------------------------------------------
def _reference_forward(outputs, batch, opt):
    def focal(pred, gt):
        p = jnp.clip(pred, 1e-4, 1.0 - 1e-4)
        pos = (gt == 1.0).astype(jnp.float32)
        neg = (gt < 1.0).astype(jnp.float32)
        neg_w = (1.0 - gt) ** 4
        pos_loss = jnp.sum(jnp.log(p) * (1.0 - p) ** 2 * pos)
        neg_loss = jnp.sum(jnp.log(1.0 - p) * p ** 2 * neg_w * neg)
        num_pos = jnp.sum(pos)
        return jnp.where(num_pos == 0, -neg_loss,
                         -(pos_loss + neg_loss) / jnp.maximum(num_pos, 1.0))

    def center(ft, cen, gt_hm):
        B, Ncls, H, W = gt_hm.shape
        D = ft.shape[1]
        ftf = ft.reshape(B, D, H * W)
        pos = (gt_hm.reshape(B, Ncls, H * W) == 1.0).astype(jnp.float32)
        diff = ftf[:, None, :, :] - cen[None, :, :, None]
        dist = jnp.sum(diff * diff, axis=2)
        num = jnp.sum(pos)
        return jnp.where(num > 0,
                         jnp.sum(pos * dist) / (2.0 * jnp.maximum(num, 1.0)), 0.0)

    def regl1(out_map, mask, ind, target):
        B, C, H, W = out_map.shape
        feat = out_map.reshape(B, C, H * W).transpose(0, 2, 1)
        pred = jnp.take_along_axis(feat, ind[:, :, None].astype(jnp.int32), axis=1)
        m = mask[..., None]
        return jnp.sum(jnp.abs(pred * m - target * m)) / (jnp.sum(mask) * C + 1e-4)

    center_loss = hm_loss = wh_loss = off_loss = 0.0
    for s in range(opt.num_stacks):
        output = outputs[s]
        hm_loss += focal(output['hm'], batch['hm']) / opt.num_stacks
        if opt.center_weight > 0:
            center_loss += center(output['ft'], output['center'],
                                  batch['hm']) / opt.num_stacks
        if opt.wh_weight > 0:
            wh_loss += regl1(output['wh'], batch['reg_mask'],
                             batch['ind'], batch['wh']) / opt.num_stacks
        if opt.reg_offset and opt.off_weight > 0:
            off_loss += regl1(output['reg'], batch['reg_mask'],
                              batch['ind'], batch['reg']) / opt.num_stacks
    loss = (opt.hm_weight * hm_loss + opt.wh_weight * wh_loss +
            opt.off_weight * off_loss + opt.center_weight * center_loss)
    return loss, {'loss': loss, 'hm_loss': hm_loss, 'wh_loss': wh_loss,
                  'off_loss': off_loss, 'center_loss': center_loss}


# ----------------------------------------------------------------------------
if __name__ == "__main__":
    key = jax.random.PRNGKey(0)
    B, Ncls, H, W = 2, 4, 16, 16
    D_ft, K = 16, 8
    HW = H * W
    ks = jax.random.split(key, 11)

    # GT: exact 1.0 peaks at 'ind' locations, soft background elsewhere.
    ind = jax.random.randint(ks[0], (B, K), 0, HW, dtype=jnp.int32)
    cls_ids = jax.random.randint(ks[1], (B, K), 0, Ncls, dtype=jnp.int32)
    gt_hm = 0.5 * jax.random.uniform(ks[2], (B, Ncls, HW), dtype=jnp.float32)
    b_idx = jnp.broadcast_to(jnp.arange(B)[:, None], (B, K))
    gt_hm = gt_hm.at[b_idx, cls_ids, ind].set(1.0).reshape(B, Ncls, H, W)

    # Model outputs (synthetic, deterministic).
    pred_hm = jax.nn.sigmoid(jax.random.normal(ks[3], (B, Ncls, H, W), dtype=jnp.float32))
    ft = 0.1 * jax.random.normal(ks[4], (B, D_ft, H, W), dtype=jnp.float32)
    wh_pred = jax.random.normal(ks[5], (B, 2, H, W), dtype=jnp.float32)
    reg_pred = jax.random.normal(ks[6], (B, 2, H, W), dtype=jnp.float32)
    center_param = 0.1 * jax.random.normal(ks[7], (Ncls, D_ft), dtype=jnp.float32)

    # Regression targets.
    reg_mask = (jax.random.uniform(ks[8], (B, K)) > 0.3).astype(jnp.float32)
    wh_tgt = 10.0 * jax.random.uniform(ks[9], (B, K, 2), dtype=jnp.float32)
    reg_tgt = jax.random.uniform(ks[10], (B, K, 2), dtype=jnp.float32)

    outputs = [{'hm': pred_hm, 'wh': wh_pred, 'reg': reg_pred,
                'ft': ft, 'center': center_param}]
    batch = {'hm': gt_hm, 'reg_mask': reg_mask, 'ind': ind,
             'wh': wh_tgt, 'reg': reg_tgt}

    opt = Opt()
    loss, loss_stats = ctdet_loss_nfs_forward(outputs, batch, opt)
    loss = jax.block_until_ready(loss)
    loss_stats = jax.tree_util.tree_map(jax.block_until_ready, loss_stats)

    # Correctness check against a pure-JAX reference.
    _, ref_stats = _reference_forward(outputs, batch, opt)
    for name in loss_stats:
        np.testing.assert_allclose(np.asarray(loss_stats[name]),
                                   np.asarray(ref_stats[name]),
                                   rtol=2e-3, atol=1e-4)

    print("KERNEL_OK")
</pallas_src>

<mosaic_0001>
module attributes {stable_mosaic.version = 11 : i64} {
  func.func @_focal_center_kernel(%arg0: i32, %arg1: i32, %arg2: memref<1x4x128xf32, #tpu.memory_space<vmem>>, %arg3: memref<1x4x128xf32, #tpu.memory_space<vmem>>, %arg4: memref<1x16x128xf32, #tpu.memory_space<vmem>>, %arg5: memref<1x4x18xf32, #tpu.memory_space<vmem>>, %arg6: memref<1x1x128xf32, #tpu.memory_space<vmem>>) attributes {dimension_semantics = [#tpu.dimension_semantics<parallel>, #tpu.dimension_semantics<arbitrary>], iteration_bounds = array<i64: 2, 2>, scalar_prefetch = 0 : i64, scratch_operands = 0 : i64, tpu.core_type = #tpu.core_type<tc>, window_params = [{transform_indices = @transform_0, window_bounds = array<i64: 1, 4, 128>}, {transform_indices = @transform_1, window_bounds = array<i64: 1, 4, 128>}, {transform_indices = @transform_2, window_bounds = array<i64: 1, 16, 128>}, {transform_indices = @transform_3, window_bounds = array<i64: 1, 4, 18>}, {transform_indices = @transform_4, window_bounds = array<i64: 1, 1, 128>}]} {
    %c0_i32 = arith.constant 0 : i32
    %0 = arith.cmpi eq, %arg1, %c0_i32 : i32
    %1 = arith.extui %0 : i1 to i32
    %c0_i32_0 = arith.constant 0 : i32
    %2 = arith.cmpi ne, %1, %c0_i32_0 : i32
    scf.if %2 {
      %cst_30 = arith.constant 0.000000e+00 : f32
      %56 = vector.broadcast %cst_30 : f32 to vector<1x4x18xf32>
      %c0_31 = arith.constant 0 : index
      %c0_32 = arith.constant 0 : index
      %c0_33 = arith.constant 0 : index
      %57 = vector.load %arg5[%c0_31, %c0_32, %c0_33] : memref<1x4x18xf32, #tpu.memory_space<vmem>>, vector<1x4x18xf32>
      tpu.vector_store %arg5[%c0_31, %c0_32, %c0_33], %56 {strides = array<i32>} : memref<1x4x18xf32, #tpu.memory_space<vmem>>, vector<1x4x18xf32>,
      %cst_34 = arith.constant 0.000000e+00 : f32
      %58 = vector.broadcast %cst_34 : f32 to vector<1x1x128xf32>
      %c0_35 = arith.constant 0 : index
      %c0_36 = arith.constant 0 : index
      %c0_37 = arith.constant 0 : index
      %59 = vector.load %arg6[%c0_35, %c0_36, %c0_37] : memref<1x1x128xf32, #tpu.memory_space<vmem>>, vector<1x1x128xf32>
      tpu.vector_store %arg6[%c0_35, %c0_36, %c0_37], %58 {strides = array<i32>} : memref<1x1x128xf32, #tpu.memory_space<vmem>>, vector<1x1x128xf32>,
    } else {
    }
    %c0 = arith.constant 0 : index
    %c0_1 = arith.constant 0 : index
    %c0_2 = arith.constant 0 : index
    %3 = vector.load %arg2[%c0, %c0_1, %c0_2] : memref<1x4x128xf32, #tpu.memory_space<vmem>>, vector<1x4x128xf32>
    %4 = vector.shape_cast %3 : vector<1x4x128xf32> to vector<4x128xf32>
    %c0_3 = arith.constant 0 : index
    %c0_4 = arith.constant 0 : index
    %c0_5 = arith.constant 0 : index
    %5 = vector.load %arg3[%c0_3, %c0_4, %c0_5] : memref<1x4x128xf32, #tpu.memory_space<vmem>>, vector<1x4x128xf32>
    %6 = vector.shape_cast %5 : vector<1x4x128xf32> to vector<4x128xf32>
    %c0_6 = arith.constant 0 : index
    %c0_7 = arith.constant 0 : index
    %c0_8 = arith.constant 0 : index
    %7 = vector.load %arg4[%c0_6, %c0_7, %c0_8] : memref<1x16x128xf32, #tpu.memory_space<vmem>>, vector<1x16x128xf32>
    %8 = vector.shape_cast %7 : vector<1x16x128xf32> to vector<16x128xf32>
    %cst = arith.constant 9.99999974E-5 : f32
    %cst_9 = arith.constant 0.999899983 : f32
    %9 = vector.broadcast %cst : f32 to vector<4x128xf32>
    %10 = arith.maximumf %9, %4 : vector<4x128xf32>
    %11 = vector.broadcast %cst_9 : f32 to vector<4x128xf32>
    %12 = arith.minimumf %11, %10 : vector<4x128xf32>
    %cst_10 = arith.constant 1.000000e+00 : f32
    %13 = vector.broadcast %cst_10 : f32 to vector<4x128xf32>
    %14 = arith.subf %13, %12 : vector<4x128xf32>
    %cst_11 = arith.constant 1.000000e+00 : f32
    %15 = vector.broadcast %cst_11 : f32 to vector<4x128xf32>
    %16 = arith.cmpf oeq, %6, %15 : vector<4x128xf32>
    %17 = arith.extui %16 : vector<4x128xi1> to vector<4x128xi32>
    %18 = arith.sitofp %17 : vector<4x128xi32> to vector<4x128xf32>
    %19 = arith.select %16, %12, %14 : vector<4x128xi1>, vector<4x128xf32>
    %20 = math.log %19 : vector<4x128xf32>
    %cst_12 = arith.constant 1.000000e+00 : f32
    %21 = vector.broadcast %cst_12 : f32 to vector<4x128xf32>
    %22 = arith.subf %21, %6 : vector<4x128xf32>
    %23 = arith.mulf %22, %22 : vector<4x128xf32>
    %24 = arith.mulf %14, %14 : vector<4x128xf32>
    %25 = arith.mulf %12, %12 : vector<4x128xf32>
    %26 = arith.mulf %23, %23 : vector<4x128xf32>
    %27 = arith.mulf %25, %26 : vector<4x128xf32>
    %28 = arith.select %16, %24, %27 : vector<4x128xi1>, vector<4x128xf32>
    %c0_13 = arith.constant 0 : index
    %c0_14 = arith.constant 0 : index
    %c0_15 = arith.constant 0 : index
    %29 = vector.load %arg6[%c0_13, %c0_14, %c0_15] : memref<1x1x128xf32, #tpu.memory_space<vmem>>, vector<1x1x128xf32>
    %30 = arith.mulf %20, %28 : vector<4x128xf32>
    %31 = vector.shape_cast %30 : vector<4x128xf32> to vector<1x4x128xf32>
    %cst_16 = arith.constant dense<0.000000e+00> : vector<1xf32>
    %32 = vector.multi_reduction <add>, %31, %cst_16 [1, 2] : vector<1x4x128xf32> to vector<1xf32>
    %33 = vector.shape_cast %32 : vector<1xf32> to vector<1x1x1xf32>
    %34 = vector.extract %33[0, 0, 0] : f32 from vector<1x1x1xf32>
    %35 = vector.broadcast %34 : f32 to vector<1x1x128xf32>
    %36 = arith.addf %29, %35 : vector<1x1x128xf32>
    %c0_17 = arith.constant 0 : index
    %c0_18 = arith.constant 0 : index
    %c0_19 = arith.constant 0 : index
    %37 = vector.load %arg6[%c0_17, %c0_18, %c0_19] : memref<1x1x128xf32, #tpu.memory_space<vmem>>, vector<1x1x128xf32>
    tpu.vector_store %arg6[%c0_17, %c0_18, %c0_19], %36 {strides = array<i32>} : memref<1x1x128xf32, #tpu.memory_space<vmem>>, vector<1x1x128xf32>,
    %38 = arith.mulf %8, %8 : vector<16x128xf32>
    %cst_20 = arith.constant dense<0.000000e+00> : vector<128xf32>
    %39 = vector.multi_reduction <add>, %38, %cst_20 [0] : vector<16x128xf32> to vector<128xf32>
    %40 = vector.shape_cast %39 : vector<128xf32> to vector<1x128xf32>
    %41 = tpu.iota {dimensions = array<i32: 0>} : vector<2x128xi32>
    %c0_i32_21 = arith.constant 0 : i32
    %42 = vector.broadcast %c0_i32_21 : i32 to vector<2x128xi32>
    %43 = arith.cmpi eq, %41, %42 : vector<2x128xi32>
    %44 = vector.shape_cast %40 : vector<1x128xf32> to vector<1x128xf32>
    %45 = vector.broadcast %44 : vector<1x128xf32> to vector<2x128xf32>
    %cst_22 = arith.constant 1.000000e+00 : f32
    %46 = vector.broadcast %cst_22 : f32 to vector<2x128xf32>
    %47 = arith.select %43, %45, %46 : vector<2x128xi1>, vector<2x128xf32>
    %48 = tpu.concatenate %8, %47 in 0 : vector<16x128xf32>, vector<2x128xf32> -> vector<18x128xf32>
    %c0_23 = arith.constant 0 : index
    %c0_24 = arith.constant 0 : index
    %c0_25 = arith.constant 0 : index
    %49 = vector.load %arg5[%c0_23, %c0_24, %c0_25] : memref<1x4x18xf32, #tpu.memory_space<vmem>>, vector<1x4x18xf32>
    %50 = vector.shape_cast %49 : vector<1x4x18xf32> to vector<4x18xf32>
    %cst_26 = arith.constant dense<0.000000e+00> : vector<4x18xf32>
    %51 = tpu.matmul %18, %48, %cst_26 {dimension_numbers = #tpu.dot_dimension_numbers<[1], [1], [0], [0], [0, 0, 1, 0], [], []>} : vector<4x128xf32>, vector<18x128xf32>, vector<4x18xf32> -> vector<4x18xf32>
    %52 = arith.addf %50, %51 : vector<4x18xf32>
    %c0_27 = arith.constant 0 : index
    %c0_28 = arith.constant 0 : index
    %c0_29 = arith.constant 0 : index
    %53 = vector.load %arg5[%c0_27, %c0_28, %c0_29] : memref<1x4x18xf32, #tpu.memory_space<vmem>>, vector<1x4x18xf32>
    %54 = vector.shape_cast %53 : vector<1x4x18xf32> to vector<4x18xf32>
    %55 = vector.shape_cast %52 : vector<4x18xf32> to vector<1x4x18xf32>
    tpu.vector_store %arg5[%c0_27, %c0_28, %c0_29], %55 {strides = array<i32>} : memref<1x4x18xf32, #tpu.memory_space<vmem>>, vector<1x4x18xf32>,
    return
  }
  func.func @transform_0(%arg0: i32, %arg1: i32) -> (i32, i32, i32) {
    %c0_i32 = arith.constant 0 : i32
    %c0_i32_0 = arith.constant 0 : i32
    return %arg0, %c0_i32, %arg1 : i32, i32, i32
  }
  func.func @transform_1(%arg0: i32, %arg1: i32) -> (i32, i32, i32) {
    %c0_i32 = arith.constant 0 : i32
    %c0_i32_0 = arith.constant 0 : i32
    return %arg0, %c0_i32, %arg1 : i32, i32, i32
  }
  func.func @transform_2(%arg0: i32, %arg1: i32) -> (i32, i32, i32) {
    %c0_i32 = arith.constant 0 : i32
    %c0_i32_0 = arith.constant 0 : i32
    return %arg0, %c0_i32, %arg1 : i32, i32, i32
  }
  func.func @transform_3(%arg0: i32, %arg1: i32) -> (i32, i32, i32) {
    %c0_i32 = arith.constant 0 : i32
    %c0_i32_0 = arith.constant 0 : i32
    %c0_i32_1 = arith.constant 0 : i32
    return %arg0, %c0_i32, %c0_i32_0 : i32, i32, i32
  }
  func.func @transform_4(%arg0: i32, %arg1: i32) -> (i32, i32, i32) {
    %c0_i32 = arith.constant 0 : i32
    %c0_i32_0 = arith.constant 0 : i32
    %c0_i32_1 = arith.constant 0 : i32
    return %arg0, %c0_i32, %c0_i32_0 : i32, i32, i32
  }
}

</mosaic_0001>

<llo_original>
// kernel: tpu_custom_call.1
$region0: #{tpu_custom_call.1}
  #allocation0 [shape = 'u32[]', space=smem, size = 0x4, offset = 0x4, fixed_abs, tag = 'smem constant byte address 0x4 - core index']
  #allocation1 [shape = 'u32[72,128]{1,0:T(1,128)}', space=vmem, size = 0x9000, scoped, tag = 'internal scratch']
  %s0 = inlined_call_operand.hbm [shape: f32[2,4,256], index: 0, kind: input, shape index: {}]
  %s1 = inlined_call_operand.hbm [shape: f32[2,4,256], index: 1, kind: input, shape index: {}]
  %s2 = inlined_call_operand.hbm [shape: f32[2,16,256], index: 2, kind: input, shape index: {}]
  %s3 = inlined_call_operand.hbm [shape: f32[2,4,18], index: 3, kind: output, shape index: {0}]
  %s4 = inlined_call_operand.hbm [shape: f32[2,1,128], index: 4, kind: output, shape index: {1}]
  %5 = xla_tuple %s3, %s4
  %s6 = sld [smem:[#allocation0]]
  $region69: #{tpu_custom_call.1} parent=0
    _
  %s8 = ssub.s32 1, %s6
  %s9 = scalar_select 0, %s8, %s6
  $region1: #{tpu_custom_call.1} parent=0
    #allocation2 [shape = 'u8[4096]{0}', space=vmem, size = 0x1000, scoped, tag = 'input window, operand 0']
    #allocation3 [shape = 's32[2]{0}', space=sflag, size = 0x8, scoped, tag = 'scoped memory for tpu_custom_call.1']
    #allocation4 [shape = 's32[2]{0}', space=sflag, size = 0x8, scoped, tag = 'scoped memory for tpu_custom_call.1']
    #allocation5 [shape = 'u8[4096]{0}', space=vmem, size = 0x1000, scoped, tag = 'input window, operand 1']
    #allocation6 [shape = 's32[2]{0}', space=sflag, size = 0x8, scoped, tag = 'scoped memory for tpu_custom_call.1']
    #allocation7 [shape = 'u8[16384]{0}', space=vmem, size = 0x4000, scoped, tag = 'input window, operand 2']
    #allocation8 [shape = 'u8[4096]{0}', space=vmem, size = 0x1000, scoped, tag = 'output window, operand 0']
    #allocation9 [shape = 'u8[1024]{0}', space=vmem, size = 0x400, scoped, tag = 'output window, operand 1']
    #allocation10 [shape = 's32[2]{0}', space=sflag, size = 0x8, scoped, tag = 'scoped memory for tpu_custom_call.1']
    %10 = vsyncpa [#allocation3], 0
    %s11 = scalar_lea.sflag [#allocation3], 1
    %12 = vsyncpa %s11, 0
    %13 = vsyncpa [#allocation6], 0
    %s14 = scalar_lea.sflag [#allocation6], 1
    %15 = vsyncpa %s14, 0
    %16 = vsyncpa [#allocation4], 0
    %s17 = scalar_lea.sflag [#allocation4], 1
    %18 = vsyncpa %s17, 0
    %19 = vsyncpa [#allocation10], 0
    %s20 = scalar_lea.sflag [#allocation10], 1
    %21 = vsyncpa %s20, 0
    loop: start=0, step=1, limit=6
    $region2: #{tpu_custom_call.1} parent=1 // loop_pre_header
      _
    $region3: #{tpu_custom_call.1} parent=1 // loop_header
      %s23 = sphi 0, %s27
      %p24 = scmp.ge.s32.totalorder %s23, 6
      %s30 = sphi 0, %s42
      %s31 = sphi 0, %s38
      %s32 = sphi 0, %s30
      %s33 = sphi 0, %s31
      %s34 = sphi 0, %s32
      %s35 = sphi 0, %s33
      %s47 = sphi 0, %s49
      %s50 = sphi 0, %s47
      %s51 = sphi 0, %s50
      %s67 = sphi 0, %s51
      %s75 = sphi 0, %s77
      %s78 = sphi 0, %s75
      %s79 = sphi 0, %s78
      %s95 = sphi 0, %s79
      %s103 = sphi 0, %s105
      %s106 = sphi 0, %s103
      %s107 = sphi 0, %s106
      %s123 = sphi 0, %s107
      %s129 = sphi 0, %s131
      %s132 = sphi 0, %s129
      %s133 = sphi 0, %s132
      %s149 = sphi 0, %s133
      %s155 = sphi 0, %s157
      %s158 = sphi 0, %s155
      %s159 = sphi 0, %s158
      %s175 = sphi 0, %s159
    $region4: #{tpu_custom_call.1} parent=1 // loop_header_branch
      %26 = sbr.rel (%p24) target = $region8
    $region5: #{tpu_custom_call.1} parent=1 // loop_body
      %s28 = ssub.s32 %s23, 1
      %s29 = ssub.s32 %s23, 2
      %s36 = sadd.s32 1, %s31
      %p37 = scmp.ge.s32.totalorder %s36, 2
      %s38 = scalar_select %p37, 0, %s36
      %s39 = sadd.s32 1, %s30
      %s40 = scalar_select %p37, %s39, %s30
      %p41 = scmp.ge.s32.totalorder %s40, 2
      %s42 = scalar_select %p41, 0, %s40
      %s43 = ssub.s32 %s30, %s42
      %s44 = ssub.s32 %s31, %s38
      %s45 = sor.u32 %s43, %s44
      %p46 = scmp.eq.s32.totalorder %s45, 0
      %s48 = sadd.s32 %s47, 1
      %s49 = scalar_select %p46, %s47, %s48
      %p52 = pneg %p46
      %p53 = scmp.eq.s32.totalorder %s23, 3
      %p54 = por %p52, %p53
      %p55 = scmp.ne.s32.totalorder %s47, %s50
      %p56 = scmp.eq.s32.totalorder %s23, 0
      %p57 = por %p55, %p56
      %p58 = scmp.ne.s32.totalorder %s47, %s50
      %p59 = scmp.eq.s32.totalorder %s28, 3
      %p60 = por %p58, %p59
      %p61 = scmp.ne.s32.totalorder %s50, %s51
      %p62 = scmp.eq.s32.totalorder %s28, 0
      %p63 = por %p61, %p62
      %p64 = scmp.ne.s32.totalorder %s50, %s51
      %p65 = scmp.eq.s32.totalorder %s29, 3
      %p66 = por %p64, %p65
      %p68 = scmp.ne.s32.totalorder %s51, %s67
      %p69 = scmp.eq.s32.totalorder %s29, 0
      %p70 = por %p68, %p69
      %s71 = ssub.s32 %s30, %s42
      %s72 = ssub.s32 %s31, %s38
      %s73 = sor.u32 %s71, %s72
      %p74 = scmp.eq.s32.totalorder %s73, 0
      %s76 = sadd.s32 %s75, 1
      %s77 = scalar_select %p74, %s75, %s76
      %p80 = pneg %p74
      %p81 = scmp.eq.s32.totalorder %s23, 3
      %p82 = por %p80, %p81
      %p83 = scmp.ne.s32.totalorder %s75, %s78
      %p84 = scmp.eq.s32.totalorder %s23, 0
      %p85 = por %p83, %p84
      %p86 = scmp.ne.s32.totalorder %s75, %s78
      %p87 = scmp.eq.s32.totalorder %s28, 3
      %p88 = por %p86, %p87
      %p89 = scmp.ne.s32.totalorder %s78, %s79
      %p90 = scmp.eq.s32.totalorder %s28, 0
      %p91 = por %p89, %p90
      %p92 = scmp.ne.s32.totalorder %s78, %s79
      %p93 = scmp.eq.s32.totalorder %s29, 3
      %p94 = por %p92, %p93
      %p96 = scmp.ne.s32.totalorder %s79, %s95
      %p97 = scmp.eq.s32.totalorder %s29, 0
      %p98 = por %p96, %p97
      %s99 = ssub.s32 %s30, %s42
      %s100 = ssub.s32 %s31, %s38
      %s101 = sor.u32 %s99, %s100
      %p102 = scmp.eq.s32.totalorder %s101, 0
      %s104 = sadd.s32 %s103, 1
      %s105 = scalar_select %p102, %s103, %s104
      %p108 = pneg %p102
      %p109 = scmp.eq.s32.totalorder %s23, 3
      %p110 = por %p108, %p109
      %p111 = scmp.ne.s32.totalorder %s103, %s106
      %p112 = scmp.eq.s32.totalorder %s23, 0
      %p113 = por %p111, %p112
      %p114 = scmp.ne.s32.totalorder %s103, %s106
      %p115 = scmp.eq.s32.totalorder %s28, 3
      %p116 = por %p114, %p115
      %p117 = scmp.ne.s32.totalorder %s106, %s107
      %p118 = scmp.eq.s32.totalorder %s28, 0
      %p119 = por %p117, %p118
      %p120 = scmp.ne.s32.totalorder %s106, %s107
      %p121 = scmp.eq.s32.totalorder %s29, 3
      %p122 = por %p120, %p121
      %p124 = scmp.ne.s32.totalorder %s107, %s123
      %p125 = scmp.eq.s32.totalorder %s29, 0
      %p126 = por %p124, %p125
      %s127 = ssub.s32 %s30, %s42
      %p128 = scmp.eq.s32.totalorder %s127, 0
      %s130 = sadd.s32 %s129, 1
      %s131 = scalar_select %p128, %s129, %s130
      %p134 = pneg %p128
      %p135 = scmp.eq.s32.totalorder %s23, 3
      %p136 = por %p134, %p135
      %p137 = scmp.ne.s32.totalorder %s129, %s132
      %p138 = scmp.eq.s32.totalorder %s23, 0
      %p139 = por %p137, %p138
      %p140 = scmp.ne.s32.totalorder %s129, %s132
      %p141 = scmp.eq.s32.totalorder %s28, 3
      %p142 = por %p140, %p141
      %p143 = scmp.ne.s32.totalorder %s132, %s133
      %p144 = scmp.eq.s32.totalorder %s28, 0
      %p145 = por %p143, %p144
      %p146 = scmp.ne.s32.totalorder %s132, %s133
      %p147 = scmp.eq.s32.totalorder %s29, 3
      %p148 = por %p146, %p147
      %p150 = scmp.ne.s32.totalorder %s133, %s149
      %p151 = scmp.eq.s32.totalorder %s29, 0
      %p152 = por %p150, %p151
      %s153 = ssub.s32 %s30, %s42
      %p154 = scmp.eq.s32.totalorder %s153, 0
      %s156 = sadd.s32 %s155, 1
      %s157 = scalar_select %p154, %s155, %s156
      %p160 = pneg %p154
      %p161 = scmp.eq.s32.totalorder %s23, 3
      %p162 = por %p160, %p161
      %p163 = scmp.ne.s32.totalorder %s155, %s158
      %p164 = scmp.eq.s32.totalorder %s23, 0
      %p165 = por %p163, %p164
      %p166 = scmp.ne.s32.totalorder %s155, %s158
      %p167 = scmp.eq.s32.totalorder %s28, 3
      %p168 = por %p166, %p167
      %p169 = scmp.ne.s32.totalorder %s158, %s159
      %p170 = scmp.eq.s32.totalorder %s28, 0
      %p171 = por %p169, %p170
      %p172 = scmp.ne.s32.totalorder %s158, %s159
      %p173 = scmp.eq.s32.totalorder %s29, 3
      %p174 = por %p172, %p173
      %p176 = scmp.ne.s32.totalorder %s159, %s175
      %p177 = scmp.eq.s32.totalorder %s29, 0
      %p178 = por %p176, %p177
      %p179 = scmp.le.s32.totalorder 1, %s23
      %p180 = scmp.lt.s32.totalorder %s23, 5
      %p181 = pnand %p179, %p180
      %p182 = pneg %p181
      // Predicated region
      $region9: #{tpu_custom_call.1} parent=5 // pred_check
        _
      $region10: #{tpu_custom_call.1} parent=5 // pred_check_branch
        %184 = sbr.rel (%p181) target = $region12
      $region11: #{tpu_custom_call.1} parent=5 // pred_region
        %s185 = ssub.s32 %s23, 1
      $region12: #{tpu_custom_call.1} parent=5 // pred_fallthru
        _
      %p186 = scmp.lt.s32.totalorder %s23, 4
      // Predicated region
      $region13: #{tpu_custom_call.1} parent=5 // pred_check
        %p187 = pneg %p186
      $region14: #{tpu_custom_call.1} parent=5 // pred_check_branch
        %189 = sbr.rel (%p187) target = $region16
      $region15: #{tpu_custom_call.1} parent=5 // pred_region
        // Predicated region
        $region17: #{tpu_custom_call.1} parent=15 // pred_check
          %p190 = pneg %p57
        $region18: #{tpu_custom_call.1} parent=15 // pred_check_branch
          %192 = sbr.rel (%p190) target = $region20
        $region19: #{tpu_custom_call.1} parent=15 // pred_region
          %s193 = sand.u32 %s47, 1
          %s194 = scalar_lea.sflag [#allocation3], %s193
          %s195 = sand.u32 %s47, 1
          %s196 = smul.addr %s195, 4
          %s197 = scalar_lea.vmem [#allocation2], %s196
          %199 = vsyncadd %s194, 0
          %s200 = smul.addr %s30, 2
          %s201 = sadd.s32 %s31, %s200
          %s202 = smul.addr %s201, 4
          %s203 = scalar_lea.hbm %s0, %s202
          %s205 = sshll.u32 %s203, 4
          %s206 = int_to_ptr.hbm [resolvable:$true] %s205
          %s207 = sshll.u32 %s197, 4
          %s208 = int_to_ptr.vmem [resolvable:$true] %s207
          %210 = dma.hbm_to_vmem [thread:$0]  %s206, 64, %s208, %s194
        $region20: #{tpu_custom_call.1} parent=15 // pred_fallthru
          _
        // Predicated region
        $region21: #{tpu_custom_call.1} parent=15 // pred_check
          %p211 = pneg %p85
        $region22: #{tpu_custom_call.1} parent=15 // pred_check_branch
          %213 = sbr.rel (%p211) target = $region24
        $region23: #{tpu_custom_call.1} parent=15 // pred_region
          %s214 = sand.u32 %s23, 1
          %s215 = scalar_lea.sflag [#allocation6], %s214
          %s216 = sand.u32 %s75, 1
          %s217 = smul.addr %s216, 4
          %s218 = scalar_lea.vmem [#allocation5], %s217
          %220 = vsyncadd %s215, 0
          %s221 = smul.addr %s30, 2
          %s222 = sadd.s32 %s31, %s221
          %s223 = smul.addr %s222, 4
          %s224 = scalar_lea.hbm %s1, %s223
          %s226 = sshll.u32 %s224, 4
          %s227 = int_to_ptr.hbm [resolvable:$true] %s226
          %s228 = sshll.u32 %s218, 4
          %s229 = int_to_ptr.vmem [resolvable:$true] %s228
          %231 = dma.hbm_to_vmem [thread:$0]  %s227, 64, %s229, %s215
        $region24: #{tpu_custom_call.1} parent=15 // pred_fallthru
          _
        // Predicated region
        $region25: #{tpu_custom_call.1} parent=15 // pred_check
          %p232 = pneg %p113
        $region26: #{tpu_custom_call.1} parent=15 // pred_check_branch
          %234 = sbr.rel (%p232) target = $region28
        $region27: #{tpu_custom_call.1} parent=15 // pred_region
          %s235 = sand.u32 %s23, 1
          %s236 = scalar_lea.sflag [#allocation6], %s235
          %s237 = sand.u32 %s103, 1
          %s238 = smul.addr %s237, 16
          %s239 = scalar_lea.vmem [#allocation7], %s238
          %241 = vsyncadd %s236, 0
          %s242 = smul.addr %s30, 4
          %s243 = sadd.s32 %s31, %s242
          %s244 = smul.addr %s243, 8
          %s245 = scalar_lea.hbm %s2, %s244
          %s246 = sshll.u32 %s245, 4
          %s247 = int_to_ptr.hbm [resolvable:$true] %s246
          %s248 = sshll.u32 %s239, 4
          %s249 = int_to_ptr.vmem [resolvable:$true] %s248
          %254 = dma.hbm_to_vmem [thread:$0]  %s247, 256, %s249, %s236, 256, 128, 8
        $region28: #{tpu_custom_call.1} parent=15 // pred_fallthru
          _
      $region16: #{tpu_custom_call.1} parent=5 // pred_fallthru
        _
      %p255 = scmp.le.s32.totalorder 1, %s23
      %p256 = scmp.lt.s32.totalorder %s23, 5
      %p257 = pnand %p255, %p256
      %p258 = pneg %p257
      // Predicated region
      $region29: #{tpu_custom_call.1} parent=5 // pred_check
        _
      $region30: #{tpu_custom_call.1} parent=5 // pred_check_branch
        %260 = sbr.rel (%p257) target = $region32
      $region31: #{tpu_custom_call.1} parent=5 // pred_region
        %s261 = ssub.s32 %s23, 1
        %s262 = sand.u32 %s50, 1
        %s263 = scalar_lea.sflag [#allocation3], %s262
        %s264 = sand.u32 %s50, 1
        %s265 = smul.addr %s264, 4
        %s266 = scalar_lea.vmem [#allocation2], %s265
        // Predicated region
        $region33: #{tpu_custom_call.1} parent=31 // pred_check
          %p267 = pneg %p63
        $region34: #{tpu_custom_call.1} parent=31 // pred_check_branch
          %269 = sbr.rel (%p267) target = $region36
        $region35: #{tpu_custom_call.1} parent=31 // pred_region
          %271 = dma.done %s263, 64
        $region36: #{tpu_custom_call.1} parent=31 // pred_fallthru
          _
        %s272 = sand.u32 %s28, 1
        %s273 = scalar_lea.sflag [#allocation6], %s272
        %s274 = sand.u32 %s78, 1
        %s275 = smul.addr %s274, 4
        %s276 = scalar_lea.vmem [#allocation5], %s275
        // Predicated region
        $region37: #{tpu_custom_call.1} parent=31 // pred_check
          %p277 = pneg %p91
        $region38: #{tpu_custom_call.1} parent=31 // pred_check_branch
          %279 = sbr.rel (%p277) target = $region40
        $region39: #{tpu_custom_call.1} parent=31 // pred_region
          %281 = dma.done %s273, 64
        $region40: #{tpu_custom_call.1} parent=31 // pred_fallthru
          _
        %s282 = sand.u32 %s28, 1
        %s283 = scalar_lea.sflag [#allocation6], %s282
        %s284 = sand.u32 %s106, 1
        %s285 = smul.addr %s284, 16
        %s286 = scalar_lea.vmem [#allocation7], %s285
        // Predicated region
        $region41: #{tpu_custom_call.1} parent=31 // pred_check
          %p287 = pneg %p119
        $region42: #{tpu_custom_call.1} parent=31 // pred_check_branch
          %289 = sbr.rel (%p287) target = $region44
        $region43: #{tpu_custom_call.1} parent=31 // pred_region
          %291 = dma.done %s283, 256
        $region44: #{tpu_custom_call.1} parent=31 // pred_fallthru
          _
        %s292 = sand.u32 %s50, 1
        %s293 = scalar_lea.sflag [#allocation3], %s292
        %s294 = sand.u32 %s50, 1
        %s295 = smul.addr %s294, 4
        %s296 = scalar_lea.vmem [#allocation2], %s295
        %p297 = pneg %p63
        %p298 = pneg %p60
        %s299 = sand.u32 %s28, 1
        %s300 = scalar_lea.sflag [#allocation6], %s299
        %s301 = sand.u32 %s78, 1
        %s302 = smul.addr %s301, 4
        %s303 = scalar_lea.vmem [#allocation5], %s302
        %p304 = pneg %p91
        %p305 = pneg %p88
        %s306 = sand.u32 %s28, 1
        %s307 = scalar_lea.sflag [#allocation6], %s306
        %s308 = sand.u32 %s106, 1
        %s309 = smul.addr %s308, 16
        %s310 = scalar_lea.vmem [#allocation7], %s309
        %p311 = pneg %p119
        %p312 = pneg %p116
        %p313 = pneg %p145
        %p314 = pneg %p142
        %s315 = sand.u32 %s132, 1
        %s316 = scalar_lea.sflag [#allocation4], %s315
        %s317 = sand.u32 %s132, 1
        %s318 = smul.addr %s317, 4
        %s319 = scalar_lea.vmem [#allocation8], %s318
        %p320 = pneg %p171
        %p321 = pneg %p168
        %s322 = sand.u32 %s158, 1
        %s323 = scalar_lea.sflag [#allocation10], %s322
        %s324 = sand.u32 %s158, 1
        %s325 = scalar_lea.vmem [#allocation9], %s324
        %p326 = scmp.eq.s32.totalorder %s33, 0
        // Predicated region
        $region45: #{tpu_custom_call.1} parent=31 // pred_check
          %p327 = pneg %p326
        $region46: #{tpu_custom_call.1} parent=31 // pred_check_branch
          %329 = sbr.rel (%p327) target = $region48
        $region47: #{tpu_custom_call.1} parent=31 // pred_region
          %vm330 = vcmask 142336
          %331 = vst.msk [vmem:[%s319] sm:$0xf] %vm330, 0.0
          %332 = vst [vmem:[%s325] sm:$0x1] 0.0
        $region48: #{tpu_custom_call.1} parent=31 // pred_fallthru
          _
        %v333 = vld [vmem:[%s266] sm:$0xf]
        %v334 = vld [vmem:[%s276] sm:$0xf]
        %v335 = vld [vmem:[%s286] sm:$0xff]
        %v336 = vld [vmem:[%s286 + $0x8] sm:$0xff]
        %v337 = vmax.f32 %v333, 0.0001
        %v338 = vmin.f32 %v337, 0.9999
        %v339 = vsub.f32 1.0, %v338
        %vm340 = vcmp.eq.f32.partialorder %v334, 1.0
        %v341 = vsel %vm340, 1, 0
        %v342 = vcvt.s32.f32 %v341
        %v343 = vsel %vm340, %v338, %v339
        %v344 = vlog2.pop %v343
        %v345 = vmul.f32 %v344, 0.6931472
        %v346 = vsub.f32 1.0, %v334
        %v347 = vmul.f32 %v346, %v346
        %v348 = vmul.f32 %v339, %v339
        %v349 = vmul.f32 %v338, %v338
        %v350 = vmul.f32 %v347, %v347
        %v351 = vmul.f32 %v349, %v350
        %v352 = vsel %vm340, %v348, %v351
        %v353 = vld [vmem:[%s325] sm:$0x1]
        %v354 = vmul.f32 %v345, %v352
        %vm355 = vcmask 1043456
        %v356 = vsel %vm355, %v354, 0.0
        %357 = vadd.xlane.f32.xlu0 %v356
        %v358 = vpop.xlane.xlu0 %357
        %v359 = vrot.slane %v358, 4
        %v360 = vadd.f32 %v358, %v359
        %v361 = vrot.slane %v360, 2
        %v362 = vadd.f32 %v360, %v361
        %v363 = vrot.slane %v362, 1
        %v364 = vadd.f32 %v362, %v363
        %s365 = vtos %v364
        %v366 = vstv %s365
        %v367 = vadd.f32 %v353, %v366
        %368 = vst [vmem:[%s325] sm:$0x1] %v367
        %v369 = vmul.f32 %v335, %v335
        %v370 = vmul.f32 %v336, %v336
        %v371 = vadd.f32 %v369, %v370
        %v372 = vrot.slane %v371, 4
        %v373 = vadd.f32 %v371, %v372
        %v374 = vrot.slane %v373, 2
        %v375 = vadd.f32 %v373, %v374
        %v376 = vrot.slane %v375, 1
        %v377 = vadd.f32 %v375, %v376
        %v378 = vlaneseq
        %v379 = vshrl.u32 %v378, 7
        %vm380 = vcmp.eq.s32.totalorder %v379, 0
        %v381 = vsel %vm380, %v377, 1.0
        %v382 = vld [vmem:[%s319] sm:$0xf]
        %383 = vmatpush.xpose.msra.mxu0 0.0
        %384 = vmatpush.xpose.msra.mxu0 0.0
        %385 = vmatpush.xpose.msra.mxu0 0.0
        %386 = vmatpush.xpose.msra.mxu0 0.0
        %387 = vmatpush.xpose.msra.mxu0 0.0
        %388 = vmatpush.xpose.msra.mxu0 0.0
        %389 = vmatpush.xpose.msra.mxu0 0.0
        %390 = vmatpush.xpose.msra.mxu0 0.0
        %391 = vmatpush.xpose.msra.mxu0 0.0
        %392 = vmatpush.xpose.msra.mxu0 0.0
        %393 = vmatpush.xpose.msra.mxu0 0.0
        %394 = vmatpush.xpose.msra.mxu0 0.0
        %395 = vmatpush.xpose.msra.mxu0 0.0
        %396 = vmatpush.xpose.msra.mxu0 %v381
        %397 = vmatpush.xpose.msra.mxu0 %v336
        %398 = vmatpush.xpose.msra.mxu0 %v335
        %399 = vmatmul.f32.gmra.mxu0 %v342
        %v400 = vpop.f32.mrf.mxu0
        %v401 = vadd.f32 0.0, %v400
        %402 = vdwg.mxu0
        %v403 = vadd.f32 %v382, %v401
        %vm404 = vcmask 142336
        %405 = vst.msk [vmem:[%s319] sm:$0xf] %vm404, %v403
        %s406 = sand.u32 %s132, 1
        %s407 = scalar_lea.sflag [#allocation4], %s406
        %s408 = sand.u32 %s132, 1
        %s409 = smul.addr %s408, 4
        %s410 = scalar_lea.vmem [#allocation8], %s409
        %s411 = sand.u32 %s158, 1
        %s412 = scalar_lea.sflag [#allocation10], %s411
        %s413 = sand.u32 %s158, 1
        %s414 = scalar_lea.vmem [#allocation9], %s413
        // Predicated region
        $region49: #{tpu_custom_call.1} parent=31 // pred_check
          %p415 = pneg %p142
        $region50: #{tpu_custom_call.1} parent=31 // pred_check_branch
          %417 = sbr.rel (%p415) target = $region52
        $region51: #{tpu_custom_call.1} parent=31 // pred_region
          %419 = vsyncadd %s407, 0
          %s420 = smul.addr %s32, 4
          %s421 = scalar_lea.hbm %s3, %s420
          %s423 = sshll.u32 %s410, 4
          %s424 = int_to_ptr.vmem [resolvable:$true] %s423
          %s425 = sshll.u32 %s421, 4
          %s426 = int_to_ptr.hbm [resolvable:$true] %s425
          %428 = dma.vmem_to_hbm [thread:$0]  %s424, 64, %s426, %s407
        $region52: #{tpu_custom_call.1} parent=31 // pred_fallthru
          _
        // Predicated region
        $region53: #{tpu_custom_call.1} parent=31 // pred_check
          %p429 = pneg %p168
        $region54: #{tpu_custom_call.1} parent=31 // pred_check_branch
          %431 = sbr.rel (%p429) target = $region56
        $region55: #{tpu_custom_call.1} parent=31 // pred_region
          %433 = vsyncadd %s412, 0
          %s434 = scalar_lea.hbm %s4, %s32
          %s436 = sshll.u32 %s414, 4
          %s437 = int_to_ptr.vmem [resolvable:$true] %s436
          %s438 = sshll.u32 %s434, 4
          %s439 = int_to_ptr.hbm [resolvable:$true] %s438
          %441 = dma.vmem_to_hbm [thread:$0]  %s437, 16, %s439, %s412
        $region56: #{tpu_custom_call.1} parent=31 // pred_fallthru
          _
      $region32: #{tpu_custom_call.1} parent=5 // pred_fallthru
        _
      %p442 = scmp.le.s32.totalorder 2, %s23
      // Predicated region
      $region57: #{tpu_custom_call.1} parent=5 // pred_check
        %p443 = pneg %p442
      $region58: #{tpu_custom_call.1} parent=5 // pred_check_branch
        %445 = sbr.rel (%p443) target = $region60
      $region59: #{tpu_custom_call.1} parent=5 // pred_region
        %s446 = ssub.s32 %s23, 2
        // Predicated region
        $region61: #{tpu_custom_call.1} parent=59 // pred_check
          %p447 = pneg %p148
        $region62: #{tpu_custom_call.1} parent=59 // pred_check_branch
          %449 = sbr.rel (%p447) target = $region64
        $region63: #{tpu_custom_call.1} parent=59 // pred_region
          %s450 = sand.u32 %s133, 1
          %s451 = scalar_lea.sflag [#allocation4], %s450
          %s452 = sand.u32 %s133, 1
          %s453 = smul.addr %s452, 4
          %s454 = scalar_lea.vmem [#allocation8], %s453
          %456 = dma.done %s451, 64
        $region64: #{tpu_custom_call.1} parent=59 // pred_fallthru
          _
        // Predicated region
        $region65: #{tpu_custom_call.1} parent=59 // pred_check
          %p457 = pneg %p174
        $region66: #{tpu_custom_call.1} parent=59 // pred_check_branch
          %459 = sbr.rel (%p457) target = $region68
        $region67: #{tpu_custom_call.1} parent=59 // pred_region
          %s460 = sand.u32 %s159, 1
          %s461 = scalar_lea.sflag [#allocation10], %s460
          %s462 = sand.u32 %s159, 1
          %s463 = scalar_lea.vmem [#allocation9], %s462
          %465 = dma.done %s461, 16
        $region68: #{tpu_custom_call.1} parent=59 // pred_fallthru
          _
      $region60: #{tpu_custom_call.1} parent=5 // pred_fallthru
        _
    $region6: #{tpu_custom_call.1} parent=1 // loop_footer
      %s27 = sadd.s32 1, %s23
    $region7: #{tpu_custom_call.1} parent=1 // loop_footer_branch
      %22 = sbr.rel target = $region3
    $region8: #{tpu_custom_call.1} parent=1 // loop_exit
      _
    %466 = vsyncpa [#allocation3], 1
    %s467 = scalar_lea.sflag [#allocation3], 1
    %468 = vsyncpa %s467, 1
    %469 = vsyncpa [#allocation6], 1
    %s470 = scalar_lea.sflag [#allocation6], 1
    %471 = vsyncpa %s470, 1
    %472 = vsyncpa [#allocation4], 1
    %s473 = scalar_lea.sflag [#allocation4], 1
    %474 = vsyncpa %s473, 1
    %475 = vsyncpa [#allocation10], 1
    %s476 = scalar_lea.sflag [#allocation10], 1
    %477 = vsyncpa %s476, 1

</llo_original>
